<compile_context>
chip_gen: v7x
topology: tpu7x:2x2x1
jax: 0.10.0
libtpu: 0.0.40
codegen_flags: <defaults>
</compile_context>

<pallas_src>
import jax
import jax.numpy as jnp
from jax.experimental import pallas as pl
from jax.experimental.pallas import tpu as pltpu


TILE_B = 512  # batch rows per grid step (>=2 tiles for batch > 512 -> v7x 2-TC split)


def _round_up(n, m):
    return ((n + m - 1) // m) * m


def _mlp_kernel(x_ref,
                w1_ref, b1_ref,
                w2_ref, b2_ref,
                w3_ref, b3_ref,
                w4_ref, b4_ref,
                w5_ref, b5_ref,
                scale_ref,
                out_ref):
    """Whole forward pass for one (TILE, 16) batch tile (everything in VMEM)."""
    x = x_ref[...].astype(jnp.bfloat16)                                # (TB, 16)

    # layer 1: 16 -> 32 (N padded to 128), relu
    h = jnp.dot(x, w1_ref[...], preferred_element_type=jnp.float32) + b1_ref[...]
    h = jnp.maximum(h, 0.0)
    h = h[:, : w2_ref.shape[0]].astype(jnp.bfloat16)                   # K-trim to 32

    # layer 2: 32 -> 64 (N padded to 128), relu
    h = jnp.dot(h, w2_ref[...], preferred_element_type=jnp.float32) + b2_ref[...]
    h = jnp.maximum(h, 0.0)
    h = h[:, : w3_ref.shape[0]].astype(jnp.bfloat16)                   # K-trim to 64

    # layer 3: 64 -> 256, tanh
    h = jnp.dot(h, w3_ref[...], preferred_element_type=jnp.float32) + b3_ref[...]
    h = jnp.tanh(h)
    h = h[:, : w4_ref.shape[0]].astype(jnp.bfloat16)                   # no-op slice (256)

    # layer 4: 256 -> 128, sigmoid
    h = jnp.dot(h, w4_ref[...], preferred_element_type=jnp.float32) + b4_ref[...]
    h = jax.nn.sigmoid(h)
    h = h[:, : w5_ref.shape[0]].astype(jnp.bfloat16)                   # no-op slice (128)

    # output layer: 128 -> 2 (padded to an 8-lane slab)
    y = jnp.dot(h, w5_ref[...], preferred_element_type=jnp.float32) + b5_ref[...]
    # lane 0: aspect_ratio = 0.5 + 2.0*sigmoid(y0); lane 1: spacing = 0.5 + 1.5*sigmoid(y1)
    out_ref[...] = 0.5 + scale_ref[...] * jax.nn.sigmoid(y)            # (TB, 8) f32


def init_params(key, input_size, hidden_sizes=(32, 64, 256, 128), output_size=2):
    """Deterministic init mimicking nn.Linear's U(-1/sqrt(fan_in), 1/sqrt(fan_in))."""
    sizes = [input_size, *hidden_sizes, output_size]
    params = []
    for i in range(len(sizes) - 1):
        key, kw, kb = jax.random.split(key, 3)
        bound = 1.0 / (sizes[i] ** 0.5)
        w = jax.random.uniform(kw, (sizes[i], sizes[i + 1]), jnp.float32, -bound, bound)
        b = jax.random.uniform(kb, (sizes[i + 1],), jnp.float32, -bound, bound)
        params.append((w, b))
    return params, key


def prepare_params(params):
    """ONE-TIME prep (hoisted out of the call path).

    Hidden layers: pad the OUT (lane) dim to 128 (lane-dense activations);
    final layer: pad OUT to 8 lanes only (narrow output slab).  The IN
    (sublane / contraction) dims stay at their real sizes -- all multiples of
    16, the bf16 packing requirement -- so no zero-padded MXU work on K.
    Weights -> bf16, biases -> (1, N) f32 rows, plus the epilogue scale row
    [2.0, 1.5, 1, ...]."""
    prepped = []
    n_layers = len(params)
    for li, (w, b) in enumerate(params):
        in_f, out_f = w.shape
        last = (li == n_layers - 1)
        out_pad = _round_up(out_f, 8) if last else _round_up(out_f, 128)
        wp = jnp.zeros((in_f, out_pad), jnp.float32).at[:, :out_f].set(
            w.astype(jnp.float32))
        bp = jnp.zeros((1, out_pad), jnp.float32).at[0, :out_f].set(
            b.astype(jnp.float32))
        prepped.append(wp.astype(jnp.bfloat16))
        prepped.append(bp)
    scale = jnp.ones((1, prepped[-1].shape[1]), jnp.float32)
    scale = scale.at[0, 0].set(2.0).at[0, 1].set(1.5)
    prepped.append(scale)
    return tuple(jax.device_put(a) for a in prepped)


def layout_parameter_optimizer_forward(x, prepped, *, tile_b=TILE_B):
    """x: (input_size,) or (B, input_size) f32.  Returns (2,) or (B, 2):
    [aspect_ratio, spacing] per row, matching the PyTorch module's forward."""
    single = (x.ndim == 1)
    xb = x[None, :] if single else x
    b, d = xb.shape
    xb = xb.astype(jnp.float32)            # f32 straight into the kernel; bf16 cast in-kernel

    # Right-size the tile: tiny batches get a single small tile (min 8 rows);
    # batches > TILE_B get multiple "parallel" tiles (v7x 2-TC split).
    tile = min(tile_b, _round_up(b, 8))
    b_pad = _round_up(b, tile)
    if b_pad != b:
        xb = jnp.pad(xb, ((0, b_pad - b), (0, 0)))

    out_w = prepped[-1].shape[1]           # 8-lane output slab
    grid = (b_pad // tile,)

    in_specs = [pl.BlockSpec((tile, d), lambda i: (i, 0))]
    # weights/biases/scale: whole-array blocks, resident across the grid
    in_specs += [pl.BlockSpec(a.shape, lambda i: (0, 0)) for a in prepped]

    out = pl.pallas_call(
        _mlp_kernel,
        out_shape=jax.ShapeDtypeStruct((b_pad, out_w), jnp.float32),
        grid=grid,
        in_specs=in_specs,
        out_specs=pl.BlockSpec((tile, out_w), lambda i: (i, 0)),
        compiler_params=pltpu.CompilerParams(
            dimension_semantics=("parallel",)),   # shards batch tiles across v7x's 2 TCs
    )(xb, *prepped)

    out = out[:b, :2]
    return out[0] if single else out


def _reference_forward(x, params):
    """Pure-JAX f32 reference of the PyTorch module (for a tolerance check)."""
    h = x
    acts = [jax.nn.relu, jax.nn.relu, jnp.tanh, jax.nn.sigmoid]
    for (w, bias), act in zip(params[:4], acts):
        h = act(h @ w + bias)
    y = h @ params[4][0] + params[4][1]
    return jnp.stack([0.5 + 2.0 * jax.nn.sigmoid(y[..., 0]),
                      0.5 + 1.5 * jax.nn.sigmoid(y[..., 1])], axis=-1)


if __name__ == "__main__":
    input_size = 16
    key = jax.random.PRNGKey(0)
    params, key = init_params(key, input_size)
    prepped = prepare_params(params)       # one-time: pad + bf16 cast, kept resident

    # --- small-batch check (single tile) ---
    key, kx = jax.random.split(key)
    batch = 16
    xb = jax.random.uniform(kx, (batch, input_size), jnp.float32)

    out_b = layout_parameter_optimizer_forward(xb, prepped)
    jax.block_until_ready(out_b)
    assert out_b.shape == (batch, 2), out_b.shape

    # single-sample path matches the original module's forward signature
    out_1 = layout_parameter_optimizer_forward(xb[0], prepped)
    jax.block_until_ready(out_1)
    assert out_1.shape == (2,), out_1.shape
    assert bool(jnp.all(jnp.abs(out_1 - out_b[0]) < 1e-2))

    # sanity: aspect_ratio in (0.5, 2.5), spacing in (0.5, 2.0)
    ar, sp = out_b[:, 0], out_b[:, 1]
    assert bool(jnp.all((ar > 0.5) & (ar < 2.5)))
    assert bool(jnp.all((sp > 0.5) & (sp < 2.0)))

    # numerical check vs f32 reference (bf16 MXU inputs, f32 accumulation)
    ref = _reference_forward(xb, params)
    max_err = float(jnp.max(jnp.abs(out_b - ref)))
    assert max_err < 5e-2, max_err

    # --- multi-tile check (ragged batch -> padded grid of 3 tiles of 512) ---
    key, kx2 = jax.random.split(key)
    batch2 = 1040
    xb2 = jax.random.uniform(kx2, (batch2, input_size), jnp.float32)
    out_b2 = layout_parameter_optimizer_forward(xb2, prepped)
    jax.block_until_ready(out_b2)
    assert out_b2.shape == (batch2, 2), out_b2.shape
    ref2 = _reference_forward(xb2, params)
    max_err2 = float(jnp.max(jnp.abs(out_b2 - ref2)))
    assert max_err2 < 5e-2, max_err2

    print("KERNEL_OK")
</pallas_src>

<mosaic_0001>
module attributes {stable_mosaic.version = 11 : i64} {
  func.func @_mlp_kernel(%arg0: i32, %arg1: memref<16x16xf32, #tpu.memory_space<vmem>>, %arg2: memref<16x128xbf16, #tpu.memory_space<vmem>>, %arg3: memref<1x128xf32, #tpu.memory_space<vmem>>, %arg4: memref<32x128xbf16, #tpu.memory_space<vmem>>, %arg5: memref<1x128xf32, #tpu.memory_space<vmem>>, %arg6: memref<64x256xbf16, #tpu.memory_space<vmem>>, %arg7: memref<1x256xf32, #tpu.memory_space<vmem>>, %arg8: memref<256x128xbf16, #tpu.memory_space<vmem>>, %arg9: memref<1x128xf32, #tpu.memory_space<vmem>>, %arg10: memref<128x8xbf16, #tpu.memory_space<vmem>>, %arg11: memref<1x8xf32, #tpu.memory_space<vmem>>, %arg12: memref<1x8xf32, #tpu.memory_space<vmem>>, %arg13: memref<16x8xf32, #tpu.memory_space<vmem>>) attributes {dimension_semantics = [#tpu.dimension_semantics<parallel>], iteration_bounds = array<i64: 1>, scalar_prefetch = 0 : i64, scratch_operands = 0 : i64, tpu.core_type = #tpu.core_type<tc>, window_params = [{transform_indices = @transform_0, window_bounds = array<i64: 16, 16>}, {pipeline_mode = #tpu.pipeline_mode<synchronous>, transform_indices = @transform_1, window_bounds = array<i64: 16, 128>}, {pipeline_mode = #tpu.pipeline_mode<synchronous>, transform_indices = @transform_2, window_bounds = array<i64: 1, 128>}, {pipeline_mode = #tpu.pipeline_mode<synchronous>, transform_indices = @transform_3, window_bounds = array<i64: 32, 128>}, {pipeline_mode = #tpu.pipeline_mode<synchronous>, transform_indices = @transform_4, window_bounds = array<i64: 1, 128>}, {pipeline_mode = #tpu.pipeline_mode<synchronous>, transform_indices = @transform_5, window_bounds = array<i64: 64, 256>}, {pipeline_mode = #tpu.pipeline_mode<synchronous>, transform_indices = @transform_6, window_bounds = array<i64: 1, 256>}, {pipeline_mode = #tpu.pipeline_mode<synchronous>, transform_indices = @transform_7, window_bounds = array<i64: 256, 128>}, {pipeline_mode = #tpu.pipeline_mode<synchronous>, transform_indices = @transform_8, window_bounds = array<i64: 1, 128>}, {pipeline_mode = #tpu.pipeline_mode<synchronous>, transform_indices = @transform_9, window_bounds = array<i64: 128, 8>}, {pipeline_mode = #tpu.pipeline_mode<synchronous>, transform_indices = @transform_10, window_bounds = array<i64: 1, 8>}, {pipeline_mode = #tpu.pipeline_mode<synchronous>, transform_indices = @transform_11, window_bounds = array<i64: 1, 8>}, {transform_indices = @transform_12, window_bounds = array<i64: 16, 8>}]} {
    %c0 = arith.constant 0 : index
    %c0_0 = arith.constant 0 : index
    %0 = vector.load %arg1[%c0, %c0_0] : memref<16x16xf32, #tpu.memory_space<vmem>>, vector<16x16xf32>
    %1 = arith.truncf %0 : vector<16x16xf32> to vector<16x16xbf16>
    %c0_1 = arith.constant 0 : index
    %c0_2 = arith.constant 0 : index
    %2 = vector.load %arg2[%c0_1, %c0_2] : memref<16x128xbf16, #tpu.memory_space<vmem>>, vector<16x128xbf16>
    %cst = arith.constant dense<0.000000e+00> : vector<16x128xf32>
    %3 = tpu.matmul %1, %2, %cst {dimension_numbers = #tpu.dot_dimension_numbers<[1], [0], [0], [1], [0, 0, 1, 1], [], []>} : vector<16x16xbf16>, vector<16x128xbf16>, vector<16x128xf32> -> vector<16x128xf32>
    %c0_3 = arith.constant 0 : index
    %c0_4 = arith.constant 0 : index
    %4 = vector.load %arg3[%c0_3, %c0_4] : memref<1x128xf32, #tpu.memory_space<vmem>>, vector<1x128xf32>
    %5 = vector.broadcast %4 : vector<1x128xf32> to vector<16x128xf32>
    %6 = arith.addf %3, %5 : vector<16x128xf32>
    %cst_5 = arith.constant 0.000000e+00 : f32
    %7 = vector.broadcast %cst_5 : f32 to vector<16x128xf32>
    %8 = arith.maximumf %6, %7 : vector<16x128xf32>
    %9 = vector.extract_strided_slice %8 {offsets = [0, 0], sizes = [16, 32], strides = [1, 1]} : vector<16x128xf32> to vector<16x32xf32>
    %10 = arith.truncf %9 : vector<16x32xf32> to vector<16x32xbf16>
    %c0_6 = arith.constant 0 : index
    %c0_7 = arith.constant 0 : index
    %11 = vector.load %arg4[%c0_6, %c0_7] : memref<32x128xbf16, #tpu.memory_space<vmem>>, vector<32x128xbf16>
    %cst_8 = arith.constant dense<0.000000e+00> : vector<16x128xf32>
    %12 = tpu.matmul %10, %11, %cst_8 {dimension_numbers = #tpu.dot_dimension_numbers<[1], [0], [0], [1], [0, 0, 1, 1], [], []>} : vector<16x32xbf16>, vector<32x128xbf16>, vector<16x128xf32> -> vector<16x128xf32>
    %c0_9 = arith.constant 0 : index
    %c0_10 = arith.constant 0 : index
    %13 = vector.load %arg5[%c0_9, %c0_10] : memref<1x128xf32, #tpu.memory_space<vmem>>, vector<1x128xf32>
    %14 = vector.broadcast %13 : vector<1x128xf32> to vector<16x128xf32>
    %15 = arith.addf %12, %14 : vector<16x128xf32>
    %cst_11 = arith.constant 0.000000e+00 : f32
    %16 = vector.broadcast %cst_11 : f32 to vector<16x128xf32>
    %17 = arith.maximumf %15, %16 : vector<16x128xf32>
    %18 = vector.extract_strided_slice %17 {offsets = [0, 0], sizes = [16, 64], strides = [1, 1]} : vector<16x128xf32> to vector<16x64xf32>
    %19 = arith.truncf %18 : vector<16x64xf32> to vector<16x64xbf16>
    %c0_12 = arith.constant 0 : index
    %c0_13 = arith.constant 0 : index
    %20 = vector.load %arg6[%c0_12, %c0_13] : memref<64x256xbf16, #tpu.memory_space<vmem>>, vector<64x256xbf16>
    %cst_14 = arith.constant dense<0.000000e+00> : vector<16x256xf32>
    %21 = tpu.matmul %19, %20, %cst_14 {dimension_numbers = #tpu.dot_dimension_numbers<[1], [0], [0], [1], [0, 0, 1, 1], [], []>} : vector<16x64xbf16>, vector<64x256xbf16>, vector<16x256xf32> -> vector<16x256xf32>
    %c0_15 = arith.constant 0 : index
    %c0_16 = arith.constant 0 : index
    %22 = vector.load %arg7[%c0_15, %c0_16] : memref<1x256xf32, #tpu.memory_space<vmem>>, vector<1x256xf32>
    %23 = vector.broadcast %22 : vector<1x256xf32> to vector<16x256xf32>
    %24 = arith.addf %21, %23 : vector<16x256xf32>
    %25 = math.tanh %24 : vector<16x256xf32>
    %26 = arith.truncf %25 : vector<16x256xf32> to vector<16x256xbf16>
    %c0_17 = arith.constant 0 : index
    %c0_18 = arith.constant 0 : index
    %27 = vector.load %arg8[%c0_17, %c0_18] : memref<256x128xbf16, #tpu.memory_space<vmem>>, vector<256x128xbf16>
    %cst_19 = arith.constant dense<0.000000e+00> : vector<16x128xf32>
    %28 = tpu.matmul %26, %27, %cst_19 {dimension_numbers = #tpu.dot_dimension_numbers<[1], [0], [0], [1], [0, 0, 1, 1], [], []>} : vector<16x256xbf16>, vector<256x128xbf16>, vector<16x128xf32> -> vector<16x128xf32>
    %c0_20 = arith.constant 0 : index
    %c0_21 = arith.constant 0 : index
    %29 = vector.load %arg9[%c0_20, %c0_21] : memref<1x128xf32, #tpu.memory_space<vmem>>, vector<1x128xf32>
    %30 = vector.broadcast %29 : vector<1x128xf32> to vector<16x128xf32>
    %31 = arith.addf %28, %30 : vector<16x128xf32>
    %32 = arith.negf %31 : vector<16x128xf32>
    %33 = math.exp %32 : vector<16x128xf32>
    %cst_22 = arith.constant 1.000000e+00 : f32
    %34 = vector.broadcast %cst_22 : f32 to vector<16x128xf32>
    %35 = arith.addf %34, %33 : vector<16x128xf32>
    %36 = arith.divf %34, %35 : vector<16x128xf32>
    %37 = arith.truncf %36 : vector<16x128xf32> to vector<16x128xbf16>
    %c0_23 = arith.constant 0 : index
    %c0_24 = arith.constant 0 : index
    %38 = vector.load %arg10[%c0_23, %c0_24] : memref<128x8xbf16, #tpu.memory_space<vmem>>, vector<128x8xbf16>
    %cst_25 = arith.constant dense<0.000000e+00> : vector<16x8xf32>
    %39 = tpu.matmul %37, %38, %cst_25 {dimension_numbers = #tpu.dot_dimension_numbers<[1], [0], [0], [1], [0, 0, 1, 1], [], []>} : vector<16x128xbf16>, vector<128x8xbf16>, vector<16x8xf32> -> vector<16x8xf32>
    %c0_26 = arith.constant 0 : index
    %c0_27 = arith.constant 0 : index
    %40 = vector.load %arg11[%c0_26, %c0_27] : memref<1x8xf32, #tpu.memory_space<vmem>>, vector<1x8xf32>
    %41 = vector.broadcast %40 : vector<1x8xf32> to vector<16x8xf32>
    %42 = arith.addf %39, %41 : vector<16x8xf32>
    %c0_28 = arith.constant 0 : index
    %c0_29 = arith.constant 0 : index
    %43 = vector.load %arg12[%c0_28, %c0_29] : memref<1x8xf32, #tpu.memory_space<vmem>>, vector<1x8xf32>
    %44 = arith.negf %42 : vector<16x8xf32>
    %45 = math.exp %44 : vector<16x8xf32>
    %cst_30 = arith.constant 1.000000e+00 : f32
    %46 = vector.broadcast %cst_30 : f32 to vector<16x8xf32>
    %47 = arith.addf %46, %45 : vector<16x8xf32>
    %48 = arith.divf %46, %47 : vector<16x8xf32>
    %49 = vector.broadcast %43 : vector<1x8xf32> to vector<16x8xf32>
    %50 = arith.mulf %49, %48 : vector<16x8xf32>
    %cst_31 = arith.constant 5.000000e-01 : f32
    %51 = vector.broadcast %cst_31 : f32 to vector<16x8xf32>
    %52 = arith.addf %51, %50 : vector<16x8xf32>
    %c0_32 = arith.constant 0 : index
    %c0_33 = arith.constant 0 : index
    %53 = vector.load %arg13[%c0_32, %c0_33] : memref<16x8xf32, #tpu.memory_space<vmem>>, vector<16x8xf32>
    tpu.vector_store %arg13[%c0_32, %c0_33], %52 {strides = array<i32>} : memref<16x8xf32, #tpu.memory_space<vmem>>, vector<16x8xf32>,
    return
  }
  func.func @transform_0(%arg0: i32) -> (i32, i32) {
    %c0_i32 = arith.constant 0 : i32
    %c0_i32_0 = arith.constant 0 : i32
    return %arg0, %c0_i32 : i32, i32
  }
  func.func @transform_1(%arg0: i32) -> (i32, i32) {
    %c0_i32 = arith.constant 0 : i32
    %c0_i32_0 = arith.constant 0 : i32
    %c0_i32_1 = arith.constant 0 : i32
    return %c0_i32, %c0_i32_0 : i32, i32
  }
  func.func @transform_2(%arg0: i32) -> (i32, i32) {
    %c0_i32 = arith.constant 0 : i32
    %c0_i32_0 = arith.constant 0 : i32
    %c0_i32_1 = arith.constant 0 : i32
    return %c0_i32, %c0_i32_0 : i32, i32
  }
  func.func @transform_3(%arg0: i32) -> (i32, i32) {
    %c0_i32 = arith.constant 0 : i32
    %c0_i32_0 = arith.constant 0 : i32
    %c0_i32_1 = arith.constant 0 : i32
    return %c0_i32, %c0_i32_0 : i32, i32
  }
  func.func @transform_4(%arg0: i32) -> (i32, i32) {
    %c0_i32 = arith.constant 0 : i32
    %c0_i32_0 = arith.constant 0 : i32
    %c0_i32_1 = arith.constant 0 : i32
    return %c0_i32, %c0_i32_0 : i32, i32
  }
  func.func @transform_5(%arg0: i32) -> (i32, i32) {
    %c0_i32 = arith.constant 0 : i32
    %c0_i32_0 = arith.constant 0 : i32
    %c0_i32_1 = arith.constant 0 : i32
    return %c0_i32, %c0_i32_0 : i32, i32
  }
  func.func @transform_6(%arg0: i32) -> (i32, i32) {
    %c0_i32 = arith.constant 0 : i32
    %c0_i32_0 = arith.constant 0 : i32
    %c0_i32_1 = arith.constant 0 : i32
    return %c0_i32, %c0_i32_0 : i32, i32
  }
  func.func @transform_7(%arg0: i32) -> (i32, i32) {
    %c0_i32 = arith.constant 0 : i32
    %c0_i32_0 = arith.constant 0 : i32
    %c0_i32_1 = arith.constant 0 : i32
    return %c0_i32, %c0_i32_0 : i32, i32
  }
  func.func @transform_8(%arg0: i32) -> (i32, i32) {
    %c0_i32 = arith.constant 0 : i32
    %c0_i32_0 = arith.constant 0 : i32
    %c0_i32_1 = arith.constant 0 : i32
    return %c0_i32, %c0_i32_0 : i32, i32
  }
  func.func @transform_9(%arg0: i32) -> (i32, i32) {
    %c0_i32 = arith.constant 0 : i32
    %c0_i32_0 = arith.constant 0 : i32
    %c0_i32_1 = arith.constant 0 : i32
    return %c0_i32, %c0_i32_0 : i32, i32
  }
  func.func @transform_10(%arg0: i32) -> (i32, i32) {
    %c0_i32 = arith.constant 0 : i32
    %c0_i32_0 = arith.constant 0 : i32
    %c0_i32_1 = arith.constant 0 : i32
    return %c0_i32, %c0_i32_0 : i32, i32
  }
  func.func @transform_11(%arg0: i32) -> (i32, i32) {
    %c0_i32 = arith.constant 0 : i32
    %c0_i32_0 = arith.constant 0 : i32
    %c0_i32_1 = arith.constant 0 : i32
    return %c0_i32, %c0_i32_0 : i32, i32
  }
  func.func @transform_12(%arg0: i32) -> (i32, i32) {
    %c0_i32 = arith.constant 0 : i32
    %c0_i32_0 = arith.constant 0 : i32
    return %arg0, %c0_i32 : i32, i32
  }
}

</mosaic_0001>

<llo_original>
// kernel: tpu_custom_call.1
$region0: #{tpu_custom_call.1}
  #allocation0 [shape = 'u32[]', space=smem, size = 0x4, offset = 0x4, fixed_abs, tag = 'smem constant byte address 0x4 - core index']
  #allocation1 [shape = 'u32[144,128]{1,0:T(1,128)}', space=vmem, size = 0x12000, scoped, tag = 'internal scratch']
  %s0 = inlined_call_operand.vmem [shape: f32[16,16], index: 0, kind: input, shape index: {}]
  %s1 = inlined_call_operand.hbm [shape: bf16[16,128], index: 1, kind: input, shape index: {}]
  %s2 = inlined_call_operand.vmem [shape: f32[1,128], index: 2, kind: input, shape index: {}]
  %s3 = inlined_call_operand.hbm [shape: bf16[32,128], index: 3, kind: input, shape index: {}]
  %s4 = inlined_call_operand.vmem [shape: f32[1,128], index: 4, kind: input, shape index: {}]
  %s5 = inlined_call_operand.vmem [shape: bf16[64,256], index: 5, kind: input, shape index: {}]
  %s6 = inlined_call_operand.vmem [shape: f32[1,256], index: 6, kind: input, shape index: {}]
  %s7 = inlined_call_operand.hbm [shape: bf16[256,128], index: 7, kind: input, shape index: {}]
  %s8 = inlined_call_operand.vmem [shape: f32[1,128], index: 8, kind: input, shape index: {}]
  %s9 = inlined_call_operand.vmem [shape: bf16[128,8], index: 9, kind: input, shape index: {}]
  %s10 = inlined_call_operand.vmem [shape: f32[1,8], index: 10, kind: input, shape index: {}]
  %s11 = inlined_call_operand.vmem [shape: f32[1,8], index: 11, kind: input, shape index: {}]
  %s12 = inlined_call_operand.vmem [shape: f32[16,8], index: 12, kind: output, shape index: {}]
  %s13 = sld [smem:[#allocation0]]
  $region70: #{tpu_custom_call.1} parent=0
    _
  %s15 = ssub.s32 1, %s13
  %s16 = scalar_select 0, %s15, %s13
  $region1: #{tpu_custom_call.1} parent=0
    #allocation2 [shape = 'u8[4096]{0}', space=vmem, size = 0x1000, scoped, tag = 'input window, operand 1, single buffered']
    #allocation3 [shape = 's32[1]{0}', space=sflag, size = 0x4, scoped, tag = 'scoped memory for tpu_custom_call.1']
    #allocation4 [shape = 'u8[8192]{0}', space=vmem, size = 0x2000, scoped, tag = 'input window, operand 3, single buffered']
    #allocation5 [shape = 's32[1]{0}', space=sflag, size = 0x4, scoped, tag = 'scoped memory for tpu_custom_call.1']
    #allocation6 [shape = 'u8[65536]{0}', space=vmem, size = 0x10000, scoped, tag = 'input window, operand 7, single buffered']
    %17 = vsyncpa [#allocation3], 0
    %18 = vsyncpa [#allocation5], 0
    // Predicated region
    $region2: #{tpu_custom_call.1} parent=1 // pred_check
      _
    $region3: #{tpu_custom_call.1} parent=1 // pred_check_branch
      %20 = sbr.rel (0) target = $region5
    $region4: #{tpu_custom_call.1} parent=1 // pred_region
      _
    $region5: #{tpu_custom_call.1} parent=1 // pred_fallthru
      _
    // Predicated region
    $region6: #{tpu_custom_call.1} parent=1 // pred_check
      _
    $region7: #{tpu_custom_call.1} parent=1 // pred_check_branch
      %22 = sbr.rel (0) target = $region9
    $region8: #{tpu_custom_call.1} parent=1 // pred_region
      %s24 = ssub.s32 128, 128
      %25 = vsyncadd [#allocation3], %s24
      %s26 = sshll.u32 [#allocation2], 4
      %s27 = int_to_ptr.vmem [resolvable:$true] %s26
      %32 = dma.hbm_to_vmem [thread:$0]  %s1, 128, %s27, [#allocation3], 64, 64, 4
    $region9: #{tpu_custom_call.1} parent=1 // pred_fallthru
      _
    // Predicated region
    $region10: #{tpu_custom_call.1} parent=1 // pred_check
      _
    $region11: #{tpu_custom_call.1} parent=1 // pred_check_branch
      %34 = sbr.rel (0) target = $region13
    $region12: #{tpu_custom_call.1} parent=1 // pred_region
      _
    $region13: #{tpu_custom_call.1} parent=1 // pred_fallthru
      _
    // Predicated region
    $region14: #{tpu_custom_call.1} parent=1 // pred_check
      _
    $region15: #{tpu_custom_call.1} parent=1 // pred_check_branch
      %36 = sbr.rel (0) target = $region17
    $region16: #{tpu_custom_call.1} parent=1 // pred_region
      %s38 = ssub.s32 256, 256
      %39 = vsyncadd [#allocation5], %s38
      %s40 = sshll.u32 [#allocation4], 4
      %s41 = int_to_ptr.vmem [resolvable:$true] %s40
      %46 = dma.hbm_to_vmem [thread:$0]  %s3, 256, %s41, [#allocation5], 64, 64, 4
    $region17: #{tpu_custom_call.1} parent=1 // pred_fallthru
      _
    // Predicated region
    $region18: #{tpu_custom_call.1} parent=1 // pred_check
      _
    $region19: #{tpu_custom_call.1} parent=1 // pred_check_branch
      %48 = sbr.rel (0) target = $region21
    $region20: #{tpu_custom_call.1} parent=1 // pred_region
      _
    $region21: #{tpu_custom_call.1} parent=1 // pred_fallthru
      _
    // Predicated region
    $region22: #{tpu_custom_call.1} parent=1 // pred_check
      _
    $region23: #{tpu_custom_call.1} parent=1 // pred_check_branch
      %50 = sbr.rel (0) target = $region25
    $region24: #{tpu_custom_call.1} parent=1 // pred_region
      _
    $region25: #{tpu_custom_call.1} parent=1 // pred_fallthru
      _
    // Predicated region
    $region26: #{tpu_custom_call.1} parent=1 // pred_check
      _
    $region27: #{tpu_custom_call.1} parent=1 // pred_check_branch
      %52 = sbr.rel (0) target = $region29
    $region28: #{tpu_custom_call.1} parent=1 // pred_region
      _
    $region29: #{tpu_custom_call.1} parent=1 // pred_fallthru
      _
    // Predicated region
    $region30: #{tpu_custom_call.1} parent=1 // pred_check
      _
    $region31: #{tpu_custom_call.1} parent=1 // pred_check_branch
      %54 = sbr.rel (0) target = $region33
    $region32: #{tpu_custom_call.1} parent=1 // pred_region
      %s56 = ssub.s32 2048, 2048
      %57 = vsyncadd [#allocation5], %s56
      %s58 = sshll.u32 [#allocation6], 4
      %s59 = int_to_ptr.vmem [resolvable:$true] %s58
      %64 = dma.hbm_to_vmem [thread:$0]  %s7, 2048, %s59, [#allocation5], 64, 64, 4
    $region33: #{tpu_custom_call.1} parent=1 // pred_fallthru
      _
    // Predicated region
    $region34: #{tpu_custom_call.1} parent=1 // pred_check
      _
    $region35: #{tpu_custom_call.1} parent=1 // pred_check_branch
      %66 = sbr.rel (0) target = $region37
    $region36: #{tpu_custom_call.1} parent=1 // pred_region
      _
    $region37: #{tpu_custom_call.1} parent=1 // pred_fallthru
      _
    // Predicated region
    $region38: #{tpu_custom_call.1} parent=1 // pred_check
      _
    $region39: #{tpu_custom_call.1} parent=1 // pred_check_branch
      %68 = sbr.rel (0) target = $region41
    $region40: #{tpu_custom_call.1} parent=1 // pred_region
      _
    $region41: #{tpu_custom_call.1} parent=1 // pred_fallthru
      _
    // Predicated region
    $region42: #{tpu_custom_call.1} parent=1 // pred_check
      _
    $region43: #{tpu_custom_call.1} parent=1 // pred_check_branch
      %70 = sbr.rel (0) target = $region45
    $region44: #{tpu_custom_call.1} parent=1 // pred_region
      _
    $region45: #{tpu_custom_call.1} parent=1 // pred_fallthru
      _
    // Predicated region
    $region46: #{tpu_custom_call.1} parent=1 // pred_check
      _
    $region47: #{tpu_custom_call.1} parent=1 // pred_check_branch
      %72 = sbr.rel (0) target = $region49
    $region48: #{tpu_custom_call.1} parent=1 // pred_region
      _
    $region49: #{tpu_custom_call.1} parent=1 // pred_fallthru
      _
    // Predicated region
    $region50: #{tpu_custom_call.1} parent=1 // pred_check
      _
    $region51: #{tpu_custom_call.1} parent=1 // pred_check_branch
      %74 = sbr.rel (0) target = $region53
    $region52: #{tpu_custom_call.1} parent=1 // pred_region
      %75 = dma.done [#allocation3], 128
    $region53: #{tpu_custom_call.1} parent=1 // pred_fallthru
      _
    // Predicated region
    $region54: #{tpu_custom_call.1} parent=1 // pred_check
      _
    $region55: #{tpu_custom_call.1} parent=1 // pred_check_branch
      %77 = sbr.rel (0) target = $region57
    $region56: #{tpu_custom_call.1} parent=1 // pred_region
      %78 = dma.done [#allocation5], 256
    $region57: #{tpu_custom_call.1} parent=1 // pred_fallthru
      _
    // Predicated region
    $region58: #{tpu_custom_call.1} parent=1 // pred_check
      _
    $region59: #{tpu_custom_call.1} parent=1 // pred_check_branch
      %80 = sbr.rel (0) target = $region61
    $region60: #{tpu_custom_call.1} parent=1 // pred_region
      %81 = dma.done [#allocation5], 2048
    $region61: #{tpu_custom_call.1} parent=1 // pred_fallthru
      _
    %v83 = vld [vmem:[%s0] sm:$0xff]
    %v84 = vld [vmem:[%s0 + $0x8] sm:$0xff]
    %v85 = vpack.c.bf16 %v84, %v83
    %v86 = vld [vmem:[#allocation2] sm:$0xf]
    %v87 = vld [vmem:[#allocation2 + $0x4] sm:$0xf]
    %v88 = vld [vmem:[%s2] sm:$0x1]
    %v90 = vlaneseq
    %v91 = vshrl.u32 %v90, 7
    %v92 = vsub.s32 0, %v91
    %v93 = vrot.slane %v88, %v92
    %v97 = vunpack.c.l.b16 %v86
    %v98 = vunpack.c.l.b16 %v87
    %v99 = vpack.c.b16 %v98, %v97
    %vm101 = vcmask 130048
    %v103 = vsel %vm101, %v85, 0
    %105 = vmatprep.subr.bf16.mxu0 0
    %106 = vmatpush1.bf16.msra.mxu0 %v99
    %107 = vmatprep.subr.bf16.mxu0 0
    %108 = vmatpush1.bf16.msra.mxu0 0
    %109 = vmatprep.subr.bf16.mxu0 0
    %110 = vmatpush1.bf16.msra.mxu0 0
    %111 = vmatprep.subr.bf16.mxu0 0
    %112 = vmatpush1.bf16.msra.mxu0 0
    %113 = vmatprep.subr.bf16.mxu0 0
    %114 = vmatpush1.bf16.msra.mxu0 0
    %115 = vmatprep.subr.bf16.mxu0 0
    %116 = vmatpush1.bf16.msra.mxu0 0
    %117 = vmatprep.subr.bf16.mxu0 0
    %118 = vmatpush1.bf16.msra.mxu0 0
    %119 = vmatprep.subr.bf16.mxu0 0
    %120 = vmatpush1.bf16.msra.mxu0 0
    %121 = vmatprep.subr.bf16.mxu0 0
    %122 = vmatpush1.bf16.msra.mxu0 0
    %123 = vmatprep.subr.bf16.mxu0 0
    %124 = vmatpush1.bf16.msra.mxu0 0
    %125 = vmatprep.subr.bf16.mxu0 0
    %126 = vmatpush1.bf16.msra.mxu0 0
    %127 = vmatprep.subr.bf16.mxu0 0
    %128 = vmatpush1.bf16.msra.mxu0 0
    %129 = vmatprep.subr.bf16.mxu0 0
    %130 = vmatpush1.bf16.msra.mxu0 0
    %131 = vmatprep.subr.bf16.mxu0 0
    %132 = vmatpush1.bf16.msra.mxu0 0
    %133 = vmatprep.subr.bf16.mxu0 0
    %134 = vmatpush1.bf16.msra.mxu0 0
    %135 = vmatprep.subr.bf16.mxu0 0
    %136 = vmatpush1.bf16.msra.mxu0 0
    %137 = vmatprep.mubr.bf16.mxu0 0
    %138 = vmatmul.mubr.bf16.gmra.mrb[0].mxu0 %v103
    %v139 = vpop.f32.mrb[0].mxu0
    %v140 = vadd.f32 %v93, %v139
    %v141 = vpop.f32.mrb[0].mxu0
    %v142 = vpop.f32.mrb[0].mxu0
    %v143 = vadd.f32 %v93, %v142
    %v144 = vpop.f32.mrb[0].mxu0
    %145 = vdwg.mxu0
    %v146 = vmax.f32 %v140, 0.0
    %v147 = vmax.f32 %v143, 0.0
    %v148 = vpack.c.bf16 %v147, %v146
    %v149 = vld [vmem:[#allocation4] sm:$0xf]
    %v150 = vld [vmem:[#allocation4 + $0x4] sm:$0xf]
    %v151 = vld [vmem:[#allocation4 + $0x8] sm:$0xf]
    %v152 = vld [vmem:[#allocation4 + $0xc] sm:$0xf]
    %v153 = vld [vmem:[%s4] sm:$0x1]
    %v155 = vlaneseq
    %v156 = vshrl.u32 %v155, 7
    %v157 = vsub.s32 0, %v156
    %v158 = vrot.slane %v153, %v157
    %v164 = vunpack.c.l.b16 %v149
    %v165 = vunpack.c.l.b16 %v150
    %v166 = vunpack.c.l.b16 %v151
    %v167 = vunpack.c.l.b16 %v152
    %v168 = vpack.c.b16 %v165, %v164
    %v169 = vpack.c.b16 %v167, %v166
    %vm172 = vcmask 261120
    %v174 = vsel %vm172, %v148, 0
    %176 = vmatprep.subr.bf16.mxu0 0
    %177 = vmatpush1.bf16.msra.mxu0 %v168
    %178 = vmatprep.subr.bf16.mxu0 0
    %179 = vmatpush1.bf16.msra.mxu0 %v169
    %180 = vmatprep.subr.bf16.mxu0 0
    %181 = vmatpush1.bf16.msra.mxu0 0
    %182 = vmatprep.subr.bf16.mxu0 0
    %183 = vmatpush1.bf16.msra.mxu0 0
    %184 = vmatprep.subr.bf16.mxu0 0
    %185 = vmatpush1.bf16.msra.mxu0 0
    %186 = vmatprep.subr.bf16.mxu0 0
    %187 = vmatpush1.bf16.msra.mxu0 0
    %188 = vmatprep.subr.bf16.mxu0 0
    %189 = vmatpush1.bf16.msra.mxu0 0
    %190 = vmatprep.subr.bf16.mxu0 0
    %191 = vmatpush1.bf16.msra.mxu0 0
    %192 = vmatprep.subr.bf16.mxu0 0
    %193 = vmatpush1.bf16.msra.mxu0 0
    %194 = vmatprep.subr.bf16.mxu0 0
    %195 = vmatpush1.bf16.msra.mxu0 0
    %196 = vmatprep.subr.bf16.mxu0 0
    %197 = vmatpush1.bf16.msra.mxu0 0
    %198 = vmatprep.subr.bf16.mxu0 0
    %199 = vmatpush1.bf16.msra.mxu0 0
    %200 = vmatprep.subr.bf16.mxu0 0
    %201 = vmatpush1.bf16.msra.mxu0 0
    %202 = vmatprep.subr.bf16.mxu0 0
    %203 = vmatpush1.bf16.msra.mxu0 0
    %204 = vmatprep.subr.bf16.mxu0 0
    %205 = vmatpush1.bf16.msra.mxu0 0
    %206 = vmatprep.subr.bf16.mxu0 0
    %207 = vmatpush1.bf16.msra.mxu0 0
    %208 = vmatprep.mubr.bf16.mxu0 0
    %209 = vmatmul.mubr.bf16.gmra.mrb[0].mxu0 %v174
    %v210 = vpop.f32.mrb[0].mxu0
    %v211 = vadd.f32 %v158, %v210
    %v212 = vpop.f32.mrb[0].mxu0
    %v213 = vpop.f32.mrb[0].mxu0
    %v214 = vadd.f32 %v158, %v213
    %v215 = vpop.f32.mrb[0].mxu0
    %216 = vdwg.mxu0
    %v217 = vmax.f32 %v211, 0.0
    %v218 = vmax.f32 %v214, 0.0
    %v219 = vpack.c.bf16 %v218, %v217
    %v220 = vld [vmem:[%s5] sm:$0xff]
    %v221 = vld [vmem:[%s5 + $0x8] sm:$0xff]
    %v222 = vld [vmem:[%s5 + $0x10] sm:$0xff]
    %v223 = vld [vmem:[%s5 + $0x18] sm:$0xff]
    %v224 = vld [vmem:[%s5 + $0x20] sm:$0xff]
    %v225 = vld [vmem:[%s5 + $0x28] sm:$0xff]
    %v226 = vld [vmem:[%s5 + $0x30] sm:$0xff]
    %v227 = vld [vmem:[%s5 + $0x38] sm:$0xff]
    %v228 = vld [vmem:[%s6] sm:$0x3]
    %v230 = vlaneseq
    %v231 = vshrl.u32 %v230, 7
    %v232 = vsub.s32 0, %v231
    %v233 = vrot.slane %v228, %v232
    %v234 = vlaneseq
    %v235 = vshrl.u32 %v234, 7
    %v236 = vsub.s32 1, %v235
    %v237 = vrot.slane %v228, %v236
    %v248 = vunpack.c.l.b16 %v220
    %v249 = vunpack.c.h.b16 %v220
    %v250 = vunpack.c.l.b16 %v221
    %v251 = vunpack.c.h.b16 %v221
    %v252 = vunpack.c.l.b16 %v222
    %v253 = vunpack.c.h.b16 %v222
    %v254 = vunpack.c.l.b16 %v223
    %v255 = vunpack.c.h.b16 %v223
    %v256 = vunpack.c.l.b16 %v224
    %v257 = vunpack.c.h.b16 %v224
    %v258 = vunpack.c.l.b16 %v225
    %v259 = vunpack.c.h.b16 %v225
    %v260 = vunpack.c.l.b16 %v226
    %v261 = vunpack.c.h.b16 %v226
    %v262 = vunpack.c.l.b16 %v227
    %v263 = vunpack.c.h.b16 %v227
    %v264 = vpack.c.b16 %v250, %v248
    %v265 = vpack.c.b16 %v251, %v249
    %v266 = vpack.c.b16 %v254, %v252
    %v267 = vpack.c.b16 %v255, %v253
    %v268 = vpack.c.b16 %v258, %v256
    %v269 = vpack.c.b16 %v259, %v257
    %v270 = vpack.c.b16 %v262, %v260
    %v271 = vpack.c.b16 %v263, %v261
    %vm280 = vcmask 523264
    %v282 = vsel %vm280, %v219, 0
    %284 = vmatprep.subr.bf16.mxu0 %v265
    %285 = vmatpush1.bf16.msra.mxu0 %v264
    %286 = vmatprep.subr.bf16.mxu0 %v267
    %287 = vmatpush1.bf16.msra.mxu0 %v266
    %288 = vmatprep.subr.bf16.mxu0 %v269
    %289 = vmatpush1.bf16.msra.mxu0 %v268
    %290 = vmatprep.subr.bf16.mxu0 %v271
    %291 = vmatpush1.bf16.msra.mxu0 %v270
    %292 = vmatprep.subr.bf16.mxu0 0
    %293 = vmatpush1.bf16.msra.mxu0 0
    %294 = vmatprep.subr.bf16.mxu0 0
    %295 = vmatpush1.bf16.msra.mxu0 0
    %296 = vmatprep.subr.bf16.mxu0 0
    %297 = vmatpush1.bf16.msra.mxu0 0
    %298 = vmatprep.subr.bf16.mxu0 0
    %299 = vmatpush1.bf16.msra.mxu0 0
    %300 = vmatprep.subr.bf16.mxu0 0
    %301 = vmatpush1.bf16.msra.mxu0 0
    %302 = vmatprep.subr.bf16.mxu0 0
    %303 = vmatpush1.bf16.msra.mxu0 0
    %304 = vmatprep.subr.bf16.mxu0 0
    %305 = vmatpush1.bf16.msra.mxu0 0
    %306 = vmatprep.subr.bf16.mxu0 0
    %307 = vmatpush1.bf16.msra.mxu0 0
    %308 = vmatprep.subr.bf16.mxu0 0
    %309 = vmatpush1.bf16.msra.mxu0 0
    %310 = vmatprep.subr.bf16.mxu0 0
    %311 = vmatpush1.bf16.msra.mxu0 0
    %312 = vmatprep.subr.bf16.mxu0 0
    %313 = vmatpush1.bf16.msra.mxu0 0
    %314 = vmatprep.subr.bf16.mxu0 0
    %315 = vmatpush1.bf16.msra.mxu0 0
    %316 = vmatprep.mubr.bf16.mxu0 0
    %317 = vmatmul.mubr.bf16.gmra.mrb[0].mxu0 %v282
    %v318 = vpop.f32.mrb[0].mxu0
    %v319 = vadd.f32 %v233, %v318
    %v320 = vpop.f32.mrb[0].mxu0
    %v321 = vadd.f32 %v237, %v320
    %v322 = vpop.f32.mrb[0].mxu0
    %v323 = vadd.f32 %v233, %v322
    %v324 = vpop.f32.mrb[0].mxu0
    %v325 = vadd.f32 %v237, %v324
    %326 = vdwg.mxu0
    %v327 = vtanh.pop %v319
    %v328 = vtanh.pop %v321
    %v329 = vtanh.pop %v323
    %v330 = vtanh.pop %v325
    %v331 = vpack.c.bf16 %v329, %v327
    %v332 = vpack.c.bf16 %v330, %v328
    %v333 = vld [vmem:[#allocation6] sm:$0xf]
    %v334 = vld [vmem:[#allocation6 + $0x4] sm:$0xf]
    %v335 = vld [vmem:[#allocation6 + $0x8] sm:$0xf]
    %v336 = vld [vmem:[#allocation6 + $0xc] sm:$0xf]
    %v337 = vld [vmem:[#allocation6 + $0x10] sm:$0xf]
    %v338 = vld [vmem:[#allocation6 + $0x14] sm:$0xf]
    %v339 = vld [vmem:[#allocation6 + $0x18] sm:$0xf]
    %v340 = vld [vmem:[#allocation6 + $0x1c] sm:$0xf]
    %v341 = vld [vmem:[#allocation6 + $0x20] sm:$0xf]
    %v342 = vld [vmem:[#allocation6 + $0x24] sm:$0xf]
    %v343 = vld [vmem:[#allocation6 + $0x28] sm:$0xf]
    %v344 = vld [vmem:[#allocation6 + $0x2c] sm:$0xf]
    %v345 = vld [vmem:[#allocation6 + $0x30] sm:$0xf]
    %v346 = vld [vmem:[#allocation6 + $0x34] sm:$0xf]
    %v347 = vld [vmem:[#allocation6 + $0x38] sm:$0xf]
    %v348 = vld [vmem:[#allocation6 + $0x3c] sm:$0xf]
    %v349 = vld [vmem:[#allocation6 + $0x40] sm:$0xf]
    %v350 = vld [vmem:[#allocation6 + $0x44] sm:$0xf]
    %v351 = vld [vmem:[#allocation6 + $0x48] sm:$0xf]
    %v352 = vld [vmem:[#allocation6 + $0x4c] sm:$0xf]
    %v353 = vld [vmem:[#allocation6 + $0x50] sm:$0xf]
    %v354 = vld [vmem:[#allocation6 + $0x54] sm:$0xf]
    %v355 = vld [vmem:[#allocation6 + $0x58] sm:$0xf]
    %v356 = vld [vmem:[#allocation6 + $0x5c] sm:$0xf]
    %v357 = vld [vmem:[#allocation6 + $0x60] sm:$0xf]
    %v358 = vld [vmem:[#allocation6 + $0x64] sm:$0xf]
    %v359 = vld [vmem:[#allocation6 + $0x68] sm:$0xf]
    %v360 = vld [vmem:[#allocation6 + $0x6c] sm:$0xf]
    %v361 = vld [vmem:[#allocation6 + $0x70] sm:$0xf]
    %v362 = vld [vmem:[#allocation6 + $0x74] sm:$0xf]
    %v363 = vld [vmem:[#allocation6 + $0x78] sm:$0xf]
    %v364 = vld [vmem:[#allocation6 + $0x7c] sm:$0xf]
    %v365 = vld [vmem:[%s8] sm:$0x1]
    %v367 = vlaneseq
    %v368 = vshrl.u32 %v367, 7
    %v369 = vsub.s32 0, %v368
    %v370 = vrot.slane %v365, %v369
    %v404 = vunpack.c.l.b16 %v333
    %v405 = vunpack.c.l.b16 %v334
    %v406 = vunpack.c.l.b16 %v335
    %v407 = vunpack.c.l.b16 %v336
    %v408 = vunpack.c.l.b16 %v337
    %v409 = vunpack.c.l.b16 %v338
    %v410 = vunpack.c.l.b16 %v339
    %v411 = vunpack.c.l.b16 %v340
    %v412 = vunpack.c.l.b16 %v341
    %v413 = vunpack.c.l.b16 %v342
    %v414 = vunpack.c.l.b16 %v343
    %v415 = vunpack.c.l.b16 %v344
    %v416 = vunpack.c.l.b16 %v345
    %v417 = vunpack.c.l.b16 %v346
    %v418 = vunpack.c.l.b16 %v347
    %v419 = vunpack.c.l.b16 %v348
    %v420 = vunpack.c.l.b16 %v349
    %v421 = vunpack.c.l.b16 %v350
    %v422 = vunpack.c.l.b16 %v351
    %v423 = vunpack.c.l.b16 %v352
    %v424 = vunpack.c.l.b16 %v353
    %v425 = vunpack.c.l.b16 %v354
    %v426 = vunpack.c.l.b16 %v355
    %v427 = vunpack.c.l.b16 %v356
    %v428 = vunpack.c.l.b16 %v357
    %v429 = vunpack.c.l.b16 %v358
    %v430 = vunpack.c.l.b16 %v359
    %v431 = vunpack.c.l.b16 %v360
    %v432 = vunpack.c.l.b16 %v361
    %v433 = vunpack.c.l.b16 %v362
    %v434 = vunpack.c.l.b16 %v363
    %v435 = vunpack.c.l.b16 %v364
    %v436 = vpack.c.b16 %v405, %v404
    %v437 = vpack.c.b16 %v407, %v406
    %v438 = vpack.c.b16 %v409, %v408
    %v439 = vpack.c.b16 %v411, %v410
    %v440 = vpack.c.b16 %v413, %v412
    %v441 = vpack.c.b16 %v415, %v414
    %v442 = vpack.c.b16 %v417, %v416
    %v443 = vpack.c.b16 %v419, %v418
    %v444 = vpack.c.b16 %v421, %v420
    %v445 = vpack.c.b16 %v423, %v422
    %v446 = vpack.c.b16 %v425, %v424
    %v447 = vpack.c.b16 %v427, %v426
    %v448 = vpack.c.b16 %v429, %v428
    %v449 = vpack.c.b16 %v431, %v430
    %v450 = vpack.c.b16 %v433, %v432
    %v451 = vpack.c.b16 %v435, %v434
    %468 = vmatprep.subr.bf16.mxu0 0
    %469 = vmatpush1.bf16.msra.mxu0 %v436
    %470 = vmatprep.subr.bf16.mxu0 0
    %471 = vmatpush1.bf16.msra.mxu0 %v437
    %472 = vmatprep.subr.bf16.mxu0 0
    %473 = vmatpush1.bf16.msra.mxu0 %v438
    %474 = vmatprep.subr.bf16.mxu0 0
    %475 = vmatpush1.bf16.msra.mxu0 %v439
    %476 = vmatprep.subr.bf16.mxu0 0
    %477 = vmatpush1.bf16.msra.mxu0 %v440
    %478 = vmatprep.subr.bf16.mxu0 0
    %479 = vmatpush1.bf16.msra.mxu0 %v441
    %480 = vmatprep.subr.bf16.mxu0 0
    %481 = vmatpush1.bf16.msra.mxu0 %v442
    %482 = vmatprep.subr.bf16.mxu0 0
    %483 = vmatpush1.bf16.msra.mxu0 %v443
    %484 = vmatprep.subr.bf16.mxu0 0
    %485 = vmatpush1.bf16.msra.mxu0 %v444
    %486 = vmatprep.subr.bf16.mxu0 0
    %487 = vmatpush1.bf16.msra.mxu0 %v445
    %488 = vmatprep.subr.bf16.mxu0 0
    %489 = vmatpush1.bf16.msra.mxu0 %v446
    %490 = vmatprep.subr.bf16.mxu0 0
    %491 = vmatpush1.bf16.msra.mxu0 %v447
    %492 = vmatprep.subr.bf16.mxu0 0
    %493 = vmatpush1.bf16.msra.mxu0 %v448
    %494 = vmatprep.subr.bf16.mxu0 0
    %495 = vmatpush1.bf16.msra.mxu0 %v449
    %496 = vmatprep.subr.bf16.mxu0 0
    %497 = vmatpush1.bf16.msra.mxu0 %v450
    %498 = vmatprep.subr.bf16.mxu0 0
    %499 = vmatpush1.bf16.msra.mxu0 %v451
    %500 = vmatprep.mubr.bf16.mxu0 %v332
    %501 = vmatmul.mubr.bf16.gmra.mrb[0].mxu0 %v331
    %v502 = vpop.f32.mrb[0].mxu0
    %v503 = vadd.f32 %v370, %v502
    %v504 = vpop.f32.mrb[0].mxu0
    %v505 = vpop.f32.mrb[0].mxu0
    %v506 = vadd.f32 %v370, %v505
    %v507 = vpop.f32.mrb[0].mxu0
    %508 = vdwg.mxu0
    %v509 = vxor.u32 %v503, 2147483648
    %v510 = vxor.u32 %v506, 2147483648
    %v511 = vmul.f32 %v509, 1.442695
    %v512 = vpow.pop %v511
    %v513 = vmul.f32 %v510, 1.442695
    %v514 = vpow.pop %v513
    %v515 = vadd.f32 %v512, 1.0
    %v516 = vadd.f32 %v514, 1.0
    %v517 = vrcp.pop %v515
    %v518 = vmul.f32 1.0, %v517
    %v519 = vrcp.pop %v516
    %v520 = vmul.f32 1.0, %v519
    %v521 = vpack.c.bf16 %v520, %v518
    %v522 = vld [vmem:[%s9] sm:$0xf]
    %v523 = vld [vmem:[%s9 + $0x4] sm:$0xf]
    %v524 = vld [vmem:[%s9 + $0x8] sm:$0xf]
    %v525 = vld [vmem:[%s9 + $0xc] sm:$0xf]
    %v526 = vld [vmem:[%s9 + $0x10] sm:$0xf]
    %v527 = vld [vmem:[%s9 + $0x14] sm:$0xf]
    %v528 = vld [vmem:[%s9 + $0x18] sm:$0xf]
    %v529 = vld [vmem:[%s9 + $0x1c] sm:$0xf]
    %v530 = vld [vmem:[%s9 + $0x20] sm:$0xf]
    %v531 = vld [vmem:[%s9 + $0x24] sm:$0xf]
    %v532 = vld [vmem:[%s9 + $0x28] sm:$0xf]
    %v533 = vld [vmem:[%s9 + $0x2c] sm:$0xf]
    %v534 = vld [vmem:[%s9 + $0x30] sm:$0xf]
    %v535 = vld [vmem:[%s9 + $0x34] sm:$0xf]
    %v536 = vld [vmem:[%s9 + $0x38] sm:$0xf]
    %v537 = vld [vmem:[%s9 + $0x3c] sm:$0xf]
    %v538 = vld [vmem:[%s10] sm:$0x1]
    %v540 = vlaneseq
    %v541 = vshrl.u32 %v540, 7
    %v542 = vsub.s32 0, %v541
    %v543 = vrot.slane %v538, %v542
    %v561 = vunpack.c.l.b16 %v522
    %v562 = vunpack.c.l.b16 %v523
    %v563 = vunpack.c.l.b16 %v524
    %v564 = vunpack.c.l.b16 %v525
    %v565 = vunpack.c.l.b16 %v526
    %v566 = vunpack.c.l.b16 %v527
    %v567 = vunpack.c.l.b16 %v528
    %v568 = vunpack.c.l.b16 %v529
    %v569 = vunpack.c.l.b16 %v530
    %v570 = vunpack.c.l.b16 %v531
    %v571 = vunpack.c.l.b16 %v532
    %v572 = vunpack.c.l.b16 %v533
    %v573 = vunpack.c.l.b16 %v534
    %v574 = vunpack.c.l.b16 %v535
    %v575 = vunpack.c.l.b16 %v536
    %v576 = vunpack.c.l.b16 %v537
    %v577 = vpack.c.b16 %v562, %v561
    %v578 = vpack.c.b16 %v564, %v563
    %v579 = vpack.c.b16 %v566, %v565
    %v580 = vpack.c.b16 %v568, %v567
    %v581 = vpack.c.b16 %v570, %v569
    %v582 = vpack.c.b16 %v572, %v571
    %v583 = vpack.c.b16 %v574, %v573
    %v584 = vpack.c.b16 %v576, %v575
    %593 = vmatprep.subr.bf16.mxu0 0
    %594 = vmatpush1.bf16.msra.mxu0 %v577
    %595 = vmatprep.subr.bf16.mxu0 0
    %596 = vmatpush1.bf16.msra.mxu0 %v578
    %597 = vmatprep.subr.bf16.mxu0 0
    %598 = vmatpush1.bf16.msra.mxu0 %v579
    %599 = vmatprep.subr.bf16.mxu0 0
    %600 = vmatpush1.bf16.msra.mxu0 %v580
    %601 = vmatprep.subr.bf16.mxu0 0
    %602 = vmatpush1.bf16.msra.mxu0 %v581
    %603 = vmatprep.subr.bf16.mxu0 0
    %604 = vmatpush1.bf16.msra.mxu0 %v582
    %605 = vmatprep.subr.bf16.mxu0 0
    %606 = vmatpush1.bf16.msra.mxu0 %v583
    %607 = vmatprep.subr.bf16.mxu0 0
    %608 = vmatpush1.bf16.msra.mxu0 %v584
    %609 = vmatprep.subr.bf16.mxu0 0
    %610 = vmatpush1.bf16.msra.mxu0 0
    %611 = vmatprep.subr.bf16.mxu0 0
    %612 = vmatpush1.bf16.msra.mxu0 0
    %613 = vmatprep.subr.bf16.mxu0 0
    %614 = vmatpush1.bf16.msra.mxu0 0
    %615 = vmatprep.subr.bf16.mxu0 0
    %616 = vmatpush1.bf16.msra.mxu0 0
    %617 = vmatprep.subr.bf16.mxu0 0
    %618 = vmatpush1.bf16.msra.mxu0 0
    %619 = vmatprep.subr.bf16.mxu0 0
    %620 = vmatpush1.bf16.msra.mxu0 0
    %621 = vmatprep.subr.bf16.mxu0 0
    %622 = vmatpush1.bf16.msra.mxu0 0
    %623 = vmatprep.subr.bf16.mxu0 0
    %624 = vmatpush1.bf16.msra.mxu0 0
    %625 = vmatprep.mubr.bf16.mxu0 0
    %626 = vmatmul.mubr.bf16.gmra.mrb[0].mxu0 %v521
    %v627 = vpop.f32.mrb[0].mxu0
    %v628 = vadd.f32 %v543, %v627
    %v629 = vpop.f32.mrb[0].mxu0
    %v630 = vpop.f32.mrb[0].mxu0
    %v631 = vadd.f32 %v543, %v630
    %v632 = vpop.f32.mrb[0].mxu0
    %633 = vdwg.mxu0
    %v634 = vld [vmem:[%s11] sm:$0x1]
    %v635 = vxor.u32 %v628, 2147483648
    %v636 = vxor.u32 %v631, 2147483648
    %v637 = vmul.f32 %v635, 1.442695
    %v638 = vpow.pop %v637
    %v639 = vmul.f32 %v636, 1.442695
    %v640 = vpow.pop %v639
    %v641 = vadd.f32 %v638, 1.0
    %v642 = vadd.f32 %v640, 1.0
    %v643 = vrcp.pop %v641
    %v644 = vmul.f32 1.0, %v643
    %v645 = vrcp.pop %v642
    %v646 = vmul.f32 1.0, %v645
    %v648 = vlaneseq
    %v649 = vshrl.u32 %v648, 7
    %v650 = vsub.s32 0, %v649
    %v651 = vrot.slane %v634, %v650
    %v653 = vmul.f32 %v651, %v644
    %v654 = vmul.f32 %v651, %v646
    %v655 = vadd.f32 %v653, 0.5
    %v656 = vadd.f32 %v654, 0.5
    %vm657 = vcmask 64512
    %658 = vst.msk [vmem:[%s12] sm:$0xff] %vm657, %v655
    %659 = vst.msk [vmem:[%s12 + $0x8] sm:$0xff] %vm657, %v656
    // Predicated region
    $region62: #{tpu_custom_call.1} parent=1 // pred_check
      _
    $region63: #{tpu_custom_call.1} parent=1 // pred_check_branch
      %661 = sbr.rel (0) target = $region65
    $region64: #{tpu_custom_call.1} parent=1 // pred_region
      _
    $region65: #{tpu_custom_call.1} parent=1 // pred_fallthru
      _
    // Predicated region
    $region66: #{tpu_custom_call.1} parent=1 // pred_check
      _
    $region67: #{tpu_custom_call.1} parent=1 // pred_check_branch
      %663 = sbr.rel (0) target = $region69
    $region68: #{tpu_custom_call.1} parent=1 // pred_region
      _
    $region69: #{tpu_custom_call.1} parent=1 // pred_fallthru
      _
    %664 = vsyncpa [#allocation3], 1
    %665 = vsyncpa [#allocation5], 1

</llo_original>
